<compile_context>
chip_gen: v7x
topology: tpu7x:2x2x1
jax: 0.10.0
libtpu: 0.0.40
codegen_flags: <defaults>
</compile_context>

<pallas_src>
import functools

import jax
import jax.numpy as jnp
from jax.experimental import pallas as pl
from jax.experimental.pallas import tpu as pltpu


# ---------------------------------------------------------------------------
# Fused single-pass kernel: one (Bt, C, S) block of x per grid step.
# ---------------------------------------------------------------------------
def _se_fused_kernel(x_ref, w1_ref, w2_ref, o_ref):
    # x_ref : (Bt, C, S)   Bt batch samples, spatial flattened on lanes
    # w1_ref: (Cr, C)      first FC weight, pre-scaled by 1/S (pool fold)
    # w2_ref: (C, Cr)      second FC weight
    # o_ref : (Bt, C, S)
    bt = x_ref.shape[0]

    # Squeeze: one batched lane-reduction over S for all Bt samples, f32 accum.
    pooled = jnp.sum(x_ref[...].astype(jnp.float32), axis=-1, keepdims=True)  # (Bt,C,1)

    for b in range(bt):                         # Bt is small & static -> unrolled
        # Excitation MLP in column form: the pooled column already has C on
        # sublanes so no relayout is needed; the tiny matvecs are hidden under
        # the HBM stream of the (Bt, C, S) block.
        h = jnp.maximum(
            jnp.dot(w1_ref[...], pooled[b],
                    preferred_element_type=jnp.float32), 0.0)               # (Cr,1)
        s = jnp.dot(w2_ref[...], h, preferred_element_type=jnp.float32)     # (C, 1)
        gate = 1.0 / (1.0 + jnp.exp(-s))        # sigmoid (exp routed to EUP)

        # Scale: broadcast the per-channel gate across all S lanes; lane-dense
        # store, cast back to the activation dtype (bf16-safe).
        o_ref[b] = (x_ref[b] * gate).astype(o_ref.dtype)


# ---------------------------------------------------------------------------
# Two-pass S-tiled path for volumes whose (C, S) slab exceeds the VMEM budget.
# ---------------------------------------------------------------------------
def _se_pool_kernel(x_ref, p_ref):
    # x_ref: (1, C, Ts); p_ref: (1, C, 1) f32 accumulator resident across S tiles.
    @pl.when(pl.program_id(1) == 0)
    def _():
        p_ref[...] = jnp.zeros_like(p_ref)

    p_ref[...] += jnp.sum(x_ref[...].astype(jnp.float32), axis=-1, keepdims=True)


def _se_scale_kernel(p_ref, w1_ref, w2_ref, x_ref, o_ref):
    # Recompute the tiny gate per S tile (O(C*Cr) flops, negligible) and rescale.
    h = jnp.maximum(
        jnp.dot(w1_ref[...], p_ref[0], preferred_element_type=jnp.float32), 0.0)
    s = jnp.dot(w2_ref[...], h, preferred_element_type=jnp.float32)
    gate = 1.0 / (1.0 + jnp.exp(-s))                                         # (C, 1)
    o_ref[0] = (x_ref[0] * gate).astype(o_ref.dtype)


# ---------------------------------------------------------------------------
# Tiling helpers.
# ---------------------------------------------------------------------------
def _pick_batch_tile(batch, sample_bytes, target_bytes):
    """Largest Bt dividing `batch` with block <= target and >= 2 grid steps."""
    min_steps = 2 if batch >= 2 else 1          # keep both v7x TensorCores busy
    best = 1
    for bt in range(1, batch + 1):
        if batch % bt or bt > 64:
            continue
        if batch // bt < min_steps:
            continue
        if bt * sample_bytes > target_bytes:
            continue
        best = bt
    return best


def _pick_spatial_tile(spatial, channels, itemsize, target_bytes):
    """Largest S tile that divides S, is a multiple of 128, fits the budget."""
    if spatial % 128 != 0:
        return None
    best = None
    t = 128
    while t <= spatial:
        if spatial % t == 0 and channels * t * itemsize <= target_bytes:
            best = t
        t += 128
    return best if best is not None else 128


def _vmem_limit(block_bytes):
    # double-buffered input + output blocks + weights/pooled + headroom
    need = 4 * block_bytes + (2 << 20)
    return int(min(64 << 20, max(16 << 20, need)))


# ---------------------------------------------------------------------------
# Public wrapper.
# ---------------------------------------------------------------------------
@functools.partial(jax.jit, static_argnames=("block_bytes_target",))
def se_layer(x, w1, w2, *, block_bytes_target=None):
    """x: (B, C, D, H, W); w1: (C//r, C); w2: (C, C//r) -> x * SE-gate."""
    B, C, D, H, W = x.shape
    S = D * H * W
    Cr = w1.shape[0]
    itemsize = jnp.dtype(x.dtype).itemsize
    target = int(block_bytes_target) if block_bytes_target else (2 << 20)

    x3 = x.reshape(B, C, S)
    w1s = w1.astype(jnp.float32) / float(S)     # fold 1/S pooling norm into FC1
    w2f = w2.astype(jnp.float32)

    sample_bytes = C * S * itemsize
    ts = None
    if sample_bytes > target:
        ts = _pick_spatial_tile(S, C, itemsize, target)
        # TODO(synk): if S is not a multiple of 128 we cannot tile it with
        # lane-dense blocks; fall back to whole-sample blocks in that case.

    if ts is None:
        # ----------------------- fused single-pass path -----------------------
        bt = _pick_batch_tile(B, sample_bytes, target)
        block_bytes = bt * sample_bytes
        cost = pl.CostEstimate(
            flops=int(2 * B * C * S + B * 2 * (2 * C * Cr)),   # pool + rescale + FCs
            transcendentals=int(B * C),                        # sigmoid
            bytes_accessed=int(2 * B * C * S * itemsize + 2 * C * Cr * 4),
        )
        out3 = pl.pallas_call(
            _se_fused_kernel,
            out_shape=jax.ShapeDtypeStruct((B, C, S), x.dtype),
            grid=(B // bt,),
            in_specs=[
                pl.BlockSpec((bt, C, S), lambda i: (i, 0, 0)),   # Bt samples / step
                pl.BlockSpec((Cr, C), lambda i: (0, 0)),         # weights resident
                pl.BlockSpec((C, Cr), lambda i: (0, 0)),
            ],
            out_specs=pl.BlockSpec((bt, C, S), lambda i: (i, 0, 0)),
            compiler_params=pltpu.CompilerParams(
                dimension_semantics=("parallel",),               # megacore on v7x
                vmem_limit_bytes=_vmem_limit(block_bytes)),
            cost_estimate=cost,
        )(x3, w1s, w2f)
    else:
        # ---------------- two-pass S-tiled path (large volumes) ----------------
        n_s = S // ts
        block_bytes = C * ts * itemsize

        pooled = pl.pallas_call(
            _se_pool_kernel,
            out_shape=jax.ShapeDtypeStruct((B, C, 1), jnp.float32),
            grid=(B, n_s),
            in_specs=[pl.BlockSpec((1, C, ts), lambda b, s: (b, 0, s))],
            out_specs=pl.BlockSpec((1, C, 1), lambda b, s: (b, 0, 0)),
            compiler_params=pltpu.CompilerParams(
                dimension_semantics=("parallel", "arbitrary"),
                vmem_limit_bytes=_vmem_limit(block_bytes)),
            cost_estimate=pl.CostEstimate(
                flops=int(B * C * S), transcendentals=0,
                bytes_accessed=int(B * C * S * itemsize + B * C * 4)),
        )(x3)

        out3 = pl.pallas_call(
            _se_scale_kernel,
            out_shape=jax.ShapeDtypeStruct((B, C, S), x.dtype),
            grid=(B, n_s),
            in_specs=[
                pl.BlockSpec((1, C, 1), lambda b, s: (b, 0, 0)),
                pl.BlockSpec((Cr, C), lambda b, s: (0, 0)),
                pl.BlockSpec((C, Cr), lambda b, s: (0, 0)),
                pl.BlockSpec((1, C, ts), lambda b, s: (b, 0, s)),
            ],
            out_specs=pl.BlockSpec((1, C, ts), lambda b, s: (b, 0, s)),
            compiler_params=pltpu.CompilerParams(
                dimension_semantics=("parallel", "parallel"),
                vmem_limit_bytes=_vmem_limit(block_bytes)),
            cost_estimate=pl.CostEstimate(
                flops=int(B * C * S + n_s * B * 2 * (2 * C * Cr)),
                transcendentals=int(n_s * B * C),
                bytes_accessed=int(2 * B * C * S * itemsize + B * C * 4
                                   + 2 * C * Cr * 4)),
        )(pooled, w1s, w2f, x3)

    return out3.reshape(B, C, D, H, W)


# ---------------------------------------------------------------------------
# Pure-JAX reference (mirrors the PyTorch SELayer forward).
# ---------------------------------------------------------------------------
def _reference(x, w1, w2):
    xf = x.astype(jnp.float32)
    y = jnp.mean(xf, axis=(2, 3, 4))                  # AdaptiveAvgPool3d(1) -> (B, C)
    y = jnp.maximum(y @ w1.T, 0.0)                    # Linear(no bias) + ReLU
    y = jax.nn.sigmoid(y @ w2.T)                      # Linear(no bias) + Sigmoid
    return xf * y[:, :, None, None, None]             # x * y.expand_as(x)


if __name__ == "__main__":
    # Small shapes consistent with the module: channel=32, reduction=16 -> hidden=2.
    B, C, D, H, W = 2, 32, 4, 8, 8
    reduction = 16
    Cr = C // reduction

    key = jax.random.PRNGKey(0)
    kx, k1, k2 = jax.random.split(key, 3)
    x = jax.random.normal(kx, (B, C, D, H, W), dtype=jnp.float32)
    # torch Linear weights are (out_features, in_features), bias=False.
    w1 = 0.3 * jax.random.normal(k1, (Cr, C), dtype=jnp.float32)
    w2 = 0.3 * jax.random.normal(k2, (C, Cr), dtype=jnp.float32)
    # TODO(synk): spectral_norm is imported but unused by SELayer; nothing to port.

    # 1) fused single-pass path.
    out = jax.block_until_ready(se_layer(x, w1, w2))
    ref = _reference(x, w1, w2)
    assert out.shape == x.shape
    assert jnp.allclose(out, ref, atol=1e-5, rtol=1e-5), (
        f"fused max abs err {jnp.max(jnp.abs(out - ref))}")

    # 2) multi-sample blocks (Bt > 1) on a larger batch (amortized step overhead,
    #    still >= 2 parallel grid steps for v7x megacore).
    x8 = jax.random.normal(kx, (8, C, D, H, W), dtype=jnp.float32)
    out8 = jax.block_until_ready(se_layer(x8, w1, w2))
    ref8 = _reference(x8, w1, w2)
    assert jnp.allclose(out8, ref8, atol=1e-5, rtol=1e-5), (
        f"batched max abs err {jnp.max(jnp.abs(out8 - ref8))}")

    # 3) two-pass S-tiled path (forced small block budget) — the large-volume plan.
    out_t = jax.block_until_ready(se_layer(x, w1, w2, block_bytes_target=16 * 1024))
    assert jnp.allclose(out_t, ref, atol=1e-5, rtol=1e-5), (
        f"tiled max abs err {jnp.max(jnp.abs(out_t - ref))}")

    # 4) bf16 activations (halves HBM traffic of the memory-bound kernel).
    xb = x.astype(jnp.bfloat16)
    out_b = jax.block_until_ready(se_layer(xb, w1, w2))
    ref_b = _reference(xb, w1, w2)
    assert jnp.allclose(out_b.astype(jnp.float32), ref_b, atol=3e-2, rtol=3e-2), (
        f"bf16 max abs err {jnp.max(jnp.abs(out_b.astype(jnp.float32) - ref_b))}")

    print("KERNEL_OK")
</pallas_src>

<mosaic_0001>
module attributes {stable_mosaic.version = 11 : i64} {
  func.func @_se_fused_kernel(%arg0: i32, %arg1: memref<1x32x256xf32, #tpu.memory_space<vmem>>, %arg2: memref<2x32xf32, #tpu.memory_space<vmem>>, %arg3: memref<32x2xf32, #tpu.memory_space<vmem>>, %arg4: memref<1x32x256xf32, #tpu.memory_space<vmem>>) attributes {dimension_semantics = [#tpu.dimension_semantics<parallel>], iteration_bounds = array<i64: 2>, scalar_prefetch = 0 : i64, scratch_operands = 0 : i64, tpu.core_type = #tpu.core_type<tc>, window_params = [{transform_indices = @transform_0, window_bounds = array<i64: 1, 32, 256>}, {pipeline_mode = #tpu.pipeline_mode<synchronous>, transform_indices = @transform_1, window_bounds = array<i64: 2, 32>}, {pipeline_mode = #tpu.pipeline_mode<synchronous>, transform_indices = @transform_2, window_bounds = array<i64: 32, 2>}, {transform_indices = @transform_3, window_bounds = array<i64: 1, 32, 256>}]} {
    %c0 = arith.constant 0 : index
    %c0_0 = arith.constant 0 : index
    %c0_1 = arith.constant 0 : index
    %0 = vector.load %arg1[%c0, %c0_0, %c0_1] : memref<1x32x256xf32, #tpu.memory_space<vmem>>, vector<1x32x256xf32>
    %cst = arith.constant dense<0.000000e+00> : vector<1x32xf32>
    %1 = vector.multi_reduction <add>, %0, %cst [2] : vector<1x32x256xf32> to vector<1x32xf32>
    %2 = vector.shape_cast %1 : vector<1x32xf32> to vector<1x32x1xf32>
    %c0_2 = arith.constant 0 : index
    %c0_3 = arith.constant 0 : index
    %3 = vector.load %arg2[%c0_2, %c0_3] : memref<2x32xf32, #tpu.memory_space<vmem>>, vector<2x32xf32>
    %4 = vector.shape_cast %2 : vector<1x32x1xf32> to vector<32x1xf32>
    %cst_4 = arith.constant dense<0.000000e+00> : vector<2x1xf32>
    %5 = tpu.matmul %3, %4, %cst_4 {dimension_numbers = #tpu.dot_dimension_numbers<[1], [0], [0], [1], [0, 0, 1, 1], [], []>} : vector<2x32xf32>, vector<32x1xf32>, vector<2x1xf32> -> vector<2x1xf32>
    %cst_5 = arith.constant 0.000000e+00 : f32
    %6 = vector.broadcast %cst_5 : f32 to vector<2x1xf32>
    %7 = arith.maximumf %5, %6 : vector<2x1xf32>
    %c0_6 = arith.constant 0 : index
    %c0_7 = arith.constant 0 : index
    %8 = vector.load %arg3[%c0_6, %c0_7] : memref<32x2xf32, #tpu.memory_space<vmem>>, vector<32x2xf32>
    %cst_8 = arith.constant dense<0.000000e+00> : vector<32x1xf32>
    %9 = tpu.matmul %8, %7, %cst_8 {dimension_numbers = #tpu.dot_dimension_numbers<[1], [0], [0], [1], [0, 0, 1, 1], [], []>} : vector<32x2xf32>, vector<2x1xf32>, vector<32x1xf32> -> vector<32x1xf32>
    %cst_9 = arith.constant 0.000000e+00 : f32
    %10 = vector.broadcast %cst_9 : f32 to vector<32x1xf32>
    %11 = arith.subf %10, %9 : vector<32x1xf32>
    %12 = math.exp %11 : vector<32x1xf32>
    %cst_10 = arith.constant 1.000000e+00 : f32
    %13 = vector.broadcast %cst_10 : f32 to vector<32x1xf32>
    %14 = arith.addf %13, %12 : vector<32x1xf32>
    %cst_11 = arith.constant 1.000000e+00 : f32
    %15 = vector.broadcast %cst_11 : f32 to vector<32x1xf32>
    %16 = arith.divf %15, %14 : vector<32x1xf32>
    %c0_12 = arith.constant 0 : index
    %c0_13 = arith.constant 0 : index
    %c0_14 = arith.constant 0 : index
    %17 = vector.load %arg1[%c0_12, %c0_13, %c0_14] : memref<1x32x256xf32, #tpu.memory_space<vmem>>, vector<1x32x256xf32>
    %18 = vector.shape_cast %17 : vector<1x32x256xf32> to vector<32x256xf32>
    %19 = vector.broadcast %16 : vector<32x1xf32> to vector<32x256xf32>
    %20 = arith.mulf %18, %19 : vector<32x256xf32>
    %c0_15 = arith.constant 0 : index
    %c0_16 = arith.constant 0 : index
    %c0_17 = arith.constant 0 : index
    %21 = vector.load %arg4[%c0_15, %c0_16, %c0_17] : memref<1x32x256xf32, #tpu.memory_space<vmem>>, vector<1x32x256xf32>
    %22 = vector.shape_cast %21 : vector<1x32x256xf32> to vector<32x256xf32>
    %23 = vector.shape_cast %20 : vector<32x256xf32> to vector<1x32x256xf32>
    tpu.vector_store %arg4[%c0_15, %c0_16, %c0_17], %23 {strides = array<i32>} : memref<1x32x256xf32, #tpu.memory_space<vmem>>, vector<1x32x256xf32>,
    return
  }
  func.func @transform_0(%arg0: i32) -> (i32, i32, i32) {
    %c0_i32 = arith.constant 0 : i32
    %c0_i32_0 = arith.constant 0 : i32
    %c0_i32_1 = arith.constant 0 : i32
    return %arg0, %c0_i32, %c0_i32_0 : i32, i32, i32
  }
  func.func @transform_1(%arg0: i32) -> (i32, i32) {
    %c0_i32 = arith.constant 0 : i32
    %c0_i32_0 = arith.constant 0 : i32
    %c0_i32_1 = arith.constant 0 : i32
    return %c0_i32, %c0_i32_0 : i32, i32
  }
  func.func @transform_2(%arg0: i32) -> (i32, i32) {
    %c0_i32 = arith.constant 0 : i32
    %c0_i32_0 = arith.constant 0 : i32
    %c0_i32_1 = arith.constant 0 : i32
    return %c0_i32, %c0_i32_0 : i32, i32
  }
  func.func @transform_3(%arg0: i32) -> (i32, i32, i32) {
    %c0_i32 = arith.constant 0 : i32
    %c0_i32_0 = arith.constant 0 : i32
    %c0_i32_1 = arith.constant 0 : i32
    return %arg0, %c0_i32, %c0_i32_0 : i32, i32, i32
  }
}

</mosaic_0001>

<llo_original>
// kernel: se_layer.1
$region0: #{se_layer.1}
  #allocation0 [shape = 'u32[]', space=smem, size = 0x4, offset = 0x4, fixed_abs, tag = 'smem constant byte address 0x4 - core index']
  #allocation1 [shape = 'u32[144,128]{1,0:T(1,128)}', space=vmem, size = 0x12000, scoped, tag = 'internal scratch']
  %s0 = inlined_call_operand.vmem [shape: f32[2,32,256], index: 0, kind: input, shape index: {}]
  %s1 = inlined_call_operand.vmem [shape: f32[2,32], index: 1, kind: input, shape index: {}]
  %s2 = inlined_call_operand.vmem [shape: f32[32,2], index: 2, kind: input, shape index: {}]
  %s3 = inlined_call_operand.vmem [shape: f32[2,32,256], index: 3, kind: output, shape index: {}]
  %s4 = sld [smem:[#allocation0]]
  $region45: #{se_layer.1} parent=0
    _
  %s6 = ssub.s32 1, %s4
  %s7 = scalar_select 0, %s6, %s4
  loop: start=0, step=1, limit=4
  $region2: #{se_layer.1} parent=0 // loop_pre_header
    _
  $region3: #{se_layer.1} parent=0 // loop_header
    %s9 = sphi 0, %s13
    %p10 = scmp.ge.s32.totalorder %s9, 4
    %s19 = sphi 0, %s21
    %s22 = sphi 0, %s19
    %s23 = sphi 0, %s22
    %s39 = sphi 0, %s23
    %s43 = sphi 0, %s43
    %s45 = sphi 0, %s43
    %s46 = sphi 0, %s45
    %s60 = sphi 0, %s46
    %s64 = sphi 0, %s64
    %s66 = sphi 0, %s64
    %s67 = sphi 0, %s66
    %s81 = sphi 0, %s67
    %s87 = sphi 0, %s89
    %s90 = sphi 0, %s87
    %s91 = sphi 0, %s90
    %s107 = sphi 0, %s91
  $region4: #{se_layer.1} parent=0 // loop_header_branch
    %12 = sbr.rel (%p10) target = $region8
  $region5: #{se_layer.1} parent=0 // loop_body
    %s14 = ssub.s32 %s9, 1
    %s15 = ssub.s32 %s9, 2
    %s16 = sadd.s32 %s9, 1
    %s17 = ssub.s32 %s9, %s16
    %p18 = scmp.eq.s32.totalorder %s17, 0
    %s20 = sadd.s32 %s19, 1
    %s21 = scalar_select %p18, %s19, %s20
    %p24 = pneg %p18
    %p25 = scmp.eq.s32.totalorder %s9, 1
    %p26 = por %p24, %p25
    %p27 = scmp.ne.s32.totalorder %s19, %s22
    %p28 = scmp.eq.s32.totalorder %s9, 0
    %p29 = por %p27, %p28
    %p30 = scmp.ne.s32.totalorder %s19, %s22
    %p31 = scmp.eq.s32.totalorder %s14, 1
    %p32 = por %p30, %p31
    %p33 = scmp.ne.s32.totalorder %s22, %s23
    %p34 = scmp.eq.s32.totalorder %s14, 0
    %p35 = por %p33, %p34
    %p36 = scmp.ne.s32.totalorder %s22, %s23
    %p37 = scmp.eq.s32.totalorder %s15, 1
    %p38 = por %p36, %p37
    %p40 = scmp.ne.s32.totalorder %s23, %s39
    %p41 = scmp.eq.s32.totalorder %s15, 0
    %p42 = por %p40, %p41
    %s44 = sadd.s32 %s43, 1
    %p47 = scmp.eq.s32.totalorder %s9, 1
    %p48 = scmp.ne.s32.totalorder %s43, %s45
    %p49 = scmp.eq.s32.totalorder %s9, 0
    %p50 = por %p48, %p49
    %p51 = scmp.ne.s32.totalorder %s43, %s45
    %p52 = scmp.eq.s32.totalorder %s14, 1
    %p53 = por %p51, %p52
    %p54 = scmp.ne.s32.totalorder %s45, %s46
    %p55 = scmp.eq.s32.totalorder %s14, 0
    %p56 = por %p54, %p55
    %p57 = scmp.ne.s32.totalorder %s45, %s46
    %p58 = scmp.eq.s32.totalorder %s15, 1
    %p59 = por %p57, %p58
    %p61 = scmp.ne.s32.totalorder %s46, %s60
    %p62 = scmp.eq.s32.totalorder %s15, 0
    %p63 = por %p61, %p62
    %s65 = sadd.s32 %s64, 1
    %p68 = scmp.eq.s32.totalorder %s9, 1
    %p69 = scmp.ne.s32.totalorder %s64, %s66
    %p70 = scmp.eq.s32.totalorder %s9, 0
    %p71 = por %p69, %p70
    %p72 = scmp.ne.s32.totalorder %s64, %s66
    %p73 = scmp.eq.s32.totalorder %s14, 1
    %p74 = por %p72, %p73
    %p75 = scmp.ne.s32.totalorder %s66, %s67
    %p76 = scmp.eq.s32.totalorder %s14, 0
    %p77 = por %p75, %p76
    %p78 = scmp.ne.s32.totalorder %s66, %s67
    %p79 = scmp.eq.s32.totalorder %s15, 1
    %p80 = por %p78, %p79
    %p82 = scmp.ne.s32.totalorder %s67, %s81
    %p83 = scmp.eq.s32.totalorder %s15, 0
    %p84 = por %p82, %p83
    %s85 = ssub.s32 %s9, %s16
    %p86 = scmp.eq.s32.totalorder %s85, 0
    %s88 = sadd.s32 %s87, 1
    %s89 = scalar_select %p86, %s87, %s88
    %p92 = pneg %p86
    %p93 = scmp.eq.s32.totalorder %s9, 1
    %p94 = por %p92, %p93
    %p95 = scmp.ne.s32.totalorder %s87, %s90
    %p96 = scmp.eq.s32.totalorder %s9, 0
    %p97 = por %p95, %p96
    %p98 = scmp.ne.s32.totalorder %s87, %s90
    %p99 = scmp.eq.s32.totalorder %s14, 1
    %p100 = por %p98, %p99
    %p101 = scmp.ne.s32.totalorder %s90, %s91
    %p102 = scmp.eq.s32.totalorder %s14, 0
    %p103 = por %p101, %p102
    %p104 = scmp.ne.s32.totalorder %s90, %s91
    %p105 = scmp.eq.s32.totalorder %s15, 1
    %p106 = por %p104, %p105
    %p108 = scmp.ne.s32.totalorder %s91, %s107
    %p109 = scmp.eq.s32.totalorder %s15, 0
    %p110 = por %p108, %p109
    %p111 = scmp.le.s32.totalorder 1, %s9
    %p112 = scmp.lt.s32.totalorder %s9, 3
    %p113 = pnand %p111, %p112
    %p114 = pneg %p113
    // Predicated region
    $region9: #{se_layer.1} parent=5 // pred_check
      _
    $region10: #{se_layer.1} parent=5 // pred_check_branch
      %116 = sbr.rel (%p113) target = $region12
    $region11: #{se_layer.1} parent=5 // pred_region
      %s117 = ssub.s32 %s9, 1
      // Predicated region
      $region13: #{se_layer.1} parent=11 // pred_check
        %p118 = pneg %p56
      $region14: #{se_layer.1} parent=11 // pred_check_branch
        %120 = sbr.rel (%p118) target = $region16
      $region15: #{se_layer.1} parent=11 // pred_region
        _
      $region16: #{se_layer.1} parent=11 // pred_fallthru
        _
      // Predicated region
      $region17: #{se_layer.1} parent=11 // pred_check
        %p121 = pneg %p77
      $region18: #{se_layer.1} parent=11 // pred_check_branch
        %123 = sbr.rel (%p121) target = $region20
      $region19: #{se_layer.1} parent=11 // pred_region
        _
      $region20: #{se_layer.1} parent=11 // pred_fallthru
        _
    $region12: #{se_layer.1} parent=5 // pred_fallthru
      _
    %p124 = scmp.lt.s32.totalorder %s9, 2
    // Predicated region
    $region21: #{se_layer.1} parent=5 // pred_check
      %p125 = pneg %p124
    $region22: #{se_layer.1} parent=5 // pred_check_branch
      %127 = sbr.rel (%p125) target = $region24
    $region23: #{se_layer.1} parent=5 // pred_region
      // Predicated region
      $region25: #{se_layer.1} parent=23 // pred_check
        %p128 = pneg %p29
      $region26: #{se_layer.1} parent=23 // pred_check_branch
        %130 = sbr.rel (%p128) target = $region28
      $region27: #{se_layer.1} parent=23 // pred_region
        %p131 = scmp.lt.s32.totalorder %s9, 1
        %s132 = scalar_select %p131, %s9, 1
        %s133 = smul.addr %s132, 8
        %s134 = smul.addr %s133, 8
        %s135 = scalar_lea.vmem %s0, %s134
      $region28: #{se_layer.1} parent=23 // pred_fallthru
        _
    $region24: #{se_layer.1} parent=5 // pred_fallthru
      _
    %p136 = scmp.le.s32.totalorder 1, %s9
    %p137 = scmp.lt.s32.totalorder %s9, 3
    %p138 = pnand %p136, %p137
    %p139 = pneg %p138
    // Predicated region
    $region29: #{se_layer.1} parent=5 // pred_check
      _
    $region30: #{se_layer.1} parent=5 // pred_check_branch
      %141 = sbr.rel (%p138) target = $region32
    $region31: #{se_layer.1} parent=5 // pred_region
      %s142 = ssub.s32 %s9, 1
      %p143 = scmp.lt.s32.totalorder %s14, 1
      %s144 = scalar_select %p143, %s14, 1
      %s145 = smul.addr %s144, 8
      %s146 = smul.addr %s145, 8
      %s147 = scalar_lea.vmem %s0, %s146
      %p148 = pneg %p35
      %p149 = pneg %p32
      %p150 = pneg %p56
      %p151 = pneg %p53
      %p152 = pneg %p77
      %p153 = pneg %p74
      %p154 = pneg %p103
      %p155 = pneg %p100
      %p156 = scmp.lt.s32.totalorder %s14, 1
      %s157 = scalar_select %p156, %s14, 1
      %s158 = smul.addr %s157, 8
      %s159 = smul.addr %s158, 8
      %s160 = scalar_lea.vmem %s3, %s159
      %p161 = scmp.lt.s32.totalorder %s14, 1
      %s162 = scalar_select %p161, %s14, 1
      %s163 = smul.addr %s162, 8
      %s164 = smul.addr %s163, 8
      %s165 = scalar_lea.vmem %s0, %s164
      %p166 = scmp.lt.s32.totalorder %s14, 1
      %s167 = scalar_select %p166, %s14, 1
      %s168 = smul.addr %s167, 8
      %s169 = smul.addr %s168, 8
      %s170 = scalar_lea.vmem %s3, %s169
      %v171 = vld [vmem:[%s165] sm:$0xff]
      %v172 = vld [vmem:[%s165 + $0x8] sm:$0xff]
      %v173 = vld [vmem:[%s165 + $0x10] sm:$0xff]
      %v174 = vld [vmem:[%s165 + $0x18] sm:$0xff]
      %v175 = vld [vmem:[%s165 + $0x20] sm:$0xff]
      %v176 = vld [vmem:[%s165 + $0x28] sm:$0xff]
      %v177 = vld [vmem:[%s165 + $0x30] sm:$0xff]
      %v178 = vld [vmem:[%s165 + $0x38] sm:$0xff]
      %v179 = vadd.f32 %v171, %v172
      %180 = vadd.xlane.f32.xlu0 %v179
      %v181 = vpop.xlane.xlu0 %180
      %v182 = vadd.f32 %v173, %v174
      %183 = vadd.xlane.f32.xlu0 %v182
      %v184 = vpop.xlane.xlu0 %183
      %v185 = vadd.f32 %v175, %v176
      %186 = vadd.xlane.f32.xlu0 %v185
      %v187 = vpop.xlane.xlu0 %186
      %v188 = vadd.f32 %v177, %v178
      %189 = vadd.xlane.f32.xlu0 %v188
      %v190 = vpop.xlane.xlu0 %189
      %v191 = vld [vmem:[%s1] sm:$0x3]
      %vm192 = vcmask 261120
      %v194 = vsel %vm192, %v191, 0
      %196 = vmatprep.subr.mxu0 0.0
      %197 = vmatpush1.msra.mxu0 %v181
      %198 = vmatprep.subr.mxu0 0.0
      %199 = vmatpush1.msra.mxu0 %v184
      %200 = vmatprep.subr.mxu0 0.0
      %201 = vmatpush1.msra.mxu0 %v187
      %202 = vmatprep.subr.mxu0 0.0
      %203 = vmatpush1.msra.mxu0 %v190
      %204 = vmatprep.subr.mxu0 0.0
      %205 = vmatpush1.msra.mxu0 0.0
      %206 = vmatprep.subr.mxu0 0.0
      %207 = vmatpush1.msra.mxu0 0.0
      %208 = vmatprep.subr.mxu0 0.0
      %209 = vmatpush1.msra.mxu0 0.0
      %210 = vmatprep.subr.mxu0 0.0
      %211 = vmatpush1.msra.mxu0 0.0
      %212 = vmatprep.subr.mxu0 0.0
      %213 = vmatpush1.msra.mxu0 0.0
      %214 = vmatprep.subr.mxu0 0.0
      %215 = vmatpush1.msra.mxu0 0.0
      %216 = vmatprep.subr.mxu0 0.0
      %217 = vmatpush1.msra.mxu0 0.0
      %218 = vmatprep.subr.mxu0 0.0
      %219 = vmatpush1.msra.mxu0 0.0
      %220 = vmatprep.subr.mxu0 0.0
      %221 = vmatpush1.msra.mxu0 0.0
      %222 = vmatprep.subr.mxu0 0.0
      %223 = vmatpush1.msra.mxu0 0.0
      %224 = vmatprep.subr.mxu0 0.0
      %225 = vmatpush1.msra.mxu0 0.0
      %226 = vmatprep.subr.mxu0 0.0
      %227 = vmatpush1.msra.mxu0 0.0
      %228 = vmatprep.subr.mxu0 0.0
      %229 = vmatpush1.msra.mxu0 0.0
      %230 = vmatprep.subr.mxu0 0.0
      %231 = vmatpush1.msra.mxu0 0.0
      %232 = vmatprep.subr.mxu0 0.0
      %233 = vmatpush1.msra.mxu0 0.0
      %234 = vmatprep.subr.mxu0 0.0
      %235 = vmatpush1.msra.mxu0 0.0
      %236 = vmatprep.subr.mxu0 0.0
      %237 = vmatpush1.msra.mxu0 0.0
      %238 = vmatprep.subr.mxu0 0.0
      %239 = vmatpush1.msra.mxu0 0.0
      %240 = vmatprep.subr.mxu0 0.0
      %241 = vmatpush1.msra.mxu0 0.0
      %242 = vmatprep.subr.mxu0 0.0
      %243 = vmatpush1.msra.mxu0 0.0
      %244 = vmatprep.subr.mxu0 0.0
      %245 = vmatpush1.msra.mxu0 0.0
      %246 = vmatprep.subr.mxu0 0.0
      %247 = vmatpush1.msra.mxu0 0.0
      %248 = vmatprep.subr.mxu0 0.0
      %249 = vmatpush1.msra.mxu0 0.0
      %250 = vmatprep.subr.mxu0 0.0
      %251 = vmatpush1.msra.mxu0 0.0
      %252 = vmatprep.subr.mxu0 0.0
      %253 = vmatpush1.msra.mxu0 0.0
      %254 = vmatprep.subr.mxu0 0.0
      %255 = vmatpush1.msra.mxu0 0.0
      %256 = vmatprep.subr.mxu0 0.0
      %257 = vmatpush1.msra.mxu0 0.0
      %258 = vmatprep.subr.mxu0 0.0
      %259 = vmatpush1.msra.mxu0 0.0
      %260 = vmatprep.mubr.f32.mxu0 0.0
      %261 = vmatmul.mubr.f32.gmra.mrb[0].mxu0 %v194
      %v262 = vpop.f32.mrb[0].mxu0
      %v263 = vadd.f32 0.0, %v262
      %v264 = vpop.f32.mrb[0].mxu0
      %265 = vdwg.mxu0
      %v266 = vmax.f32 %v263, 0.0
      %v267 = vld [vmem:[%s2] sm:$0xff]
      %v268 = vld [vmem:[%s2 + $0x8] sm:$0xff]
      %v269 = vld [vmem:[%s2 + $0x10] sm:$0xff]
      %v270 = vld [vmem:[%s2 + $0x18] sm:$0xff]
      %vm271 = vcmask 15360
      %v273 = vsel %vm271, %v267, 0
      %v276 = vsel %vm271, %v268, 0
      %v279 = vsel %vm271, %v269, 0
      %v282 = vsel %vm271, %v270, 0
      %vm284 = vcmask 1041408
      %v286 = vsel %vm284, %v266, 0
      %288 = vmatprep.subr.mxu0 0.0
      %289 = vmatpush1.msra.mxu0 %v286
      %290 = vmatprep.subr.mxu0 0.0
      %291 = vmatpush1.msra.mxu0 0.0
      %292 = vmatprep.subr.mxu0 0.0
      %293 = vmatpush1.msra.mxu0 0.0
      %294 = vmatprep.subr.mxu0 0.0
      %295 = vmatpush1.msra.mxu0 0.0
      %296 = vmatprep.subr.mxu0 0.0
      %297 = vmatpush1.msra.mxu0 0.0
      %298 = vmatprep.subr.mxu0 0.0
      %299 = vmatpush1.msra.mxu0 0.0
      %300 = vmatprep.subr.mxu0 0.0
      %301 = vmatpush1.msra.mxu0 0.0
      %302 = vmatprep.subr.mxu0 0.0
      %303 = vmatpush1.msra.mxu0 0.0
      %304 = vmatprep.subr.mxu0 0.0
      %305 = vmatpush1.msra.mxu0 0.0
      %306 = vmatprep.subr.mxu0 0.0
      %307 = vmatpush1.msra.mxu0 0.0
      %308 = vmatprep.subr.mxu0 0.0
      %309 = vmatpush1.msra.mxu0 0.0
      %310 = vmatprep.subr.mxu0 0.0
      %311 = vmatpush1.msra.mxu0 0.0
      %312 = vmatprep.subr.mxu0 0.0
      %313 = vmatpush1.msra.mxu0 0.0
      %314 = vmatprep.subr.mxu0 0.0
      %315 = vmatpush1.msra.mxu0 0.0
      %316 = vmatprep.subr.mxu0 0.0
      %317 = vmatpush1.msra.mxu0 0.0
      %318 = vmatprep.subr.mxu0 0.0
      %319 = vmatpush1.msra.mxu0 0.0
      %320 = vmatprep.subr.mxu0 0.0
      %321 = vmatpush1.msra.mxu0 0.0
      %322 = vmatprep.subr.mxu0 0.0
      %323 = vmatpush1.msra.mxu0 0.0
      %324 = vmatprep.subr.mxu0 0.0
      %325 = vmatpush1.msra.mxu0 0.0
      %326 = vmatprep.subr.mxu0 0.0
      %327 = vmatpush1.msra.mxu0 0.0
      %328 = vmatprep.subr.mxu0 0.0
      %329 = vmatpush1.msra.mxu0 0.0
      %330 = vmatprep.subr.mxu0 0.0
      %331 = vmatpush1.msra.mxu0 0.0
      %332 = vmatprep.subr.mxu0 0.0
      %333 = vmatpush1.msra.mxu0 0.0
      %334 = vmatprep.subr.mxu0 0.0
      %335 = vmatpush1.msra.mxu0 0.0
      %336 = vmatprep.subr.mxu0 0.0
      %337 = vmatpush1.msra.mxu0 0.0
      %338 = vmatprep.subr.mxu0 0.0
      %339 = vmatpush1.msra.mxu0 0.0
      %340 = vmatprep.subr.mxu0 0.0
      %341 = vmatpush1.msra.mxu0 0.0
      %342 = vmatprep.subr.mxu0 0.0
      %343 = vmatpush1.msra.mxu0 0.0
      %344 = vmatprep.subr.mxu0 0.0
      %345 = vmatpush1.msra.mxu0 0.0
      %346 = vmatprep.subr.mxu0 0.0
      %347 = vmatpush1.msra.mxu0 0.0
      %348 = vmatprep.subr.mxu0 0.0
      %349 = vmatpush1.msra.mxu0 0.0
      %350 = vmatprep.subr.mxu0 0.0
      %351 = vmatpush1.msra.mxu0 0.0
      %352 = vmatprep.mubr.f32.mxu0 0.0
      %353 = vmatmul.mubr.f32.gmra.mrb[0].mxu0 %v273
      %v354 = vpop.f32.mrb[0].mxu0
      %v355 = vadd.f32 0.0, %v354
      %v356 = vpop.f32.mrb[0].mxu0
      %357 = vmatprep.mubr.f32.mxu0 0.0
      %358 = vmatmul.mubr.f32.gmra.mrb[0].mxu0 %v276
      %v359 = vpop.f32.mrb[0].mxu0
      %v360 = vadd.f32 0.0, %v359
      %v361 = vpop.f32.mrb[0].mxu0
      %362 = vmatprep.mubr.f32.mxu0 0.0
      %363 = vmatmul.mubr.f32.gmra.mrb[0].mxu0 %v279
      %v364 = vpop.f32.mrb[0].mxu0
      %v365 = vadd.f32 0.0, %v364
      %v366 = vpop.f32.mrb[0].mxu0
      %367 = vmatprep.mubr.f32.mxu0 0.0
      %368 = vmatmul.mubr.f32.gmra.mrb[0].mxu0 %v282
      %v369 = vpop.f32.mrb[0].mxu0
      %v370 = vadd.f32 0.0, %v369
      %v371 = vpop.f32.mrb[0].mxu0
      %372 = vdwg.mxu0
      %v373 = vsub.f32 0.0, %v355
      %v374 = vsub.f32 0.0, %v360
      %v375 = vsub.f32 0.0, %v365
      %v376 = vsub.f32 0.0, %v370
      %v377 = vmul.f32 %v373, 1.442695
      %v378 = vpow.pop %v377
      %v379 = vmul.f32 %v374, 1.442695
      %v380 = vpow.pop %v379
      %v381 = vmul.f32 %v375, 1.442695
      %v382 = vpow.pop %v381
      %v383 = vmul.f32 %v376, 1.442695
      %v384 = vpow.pop %v383
      %v385 = vadd.f32 %v378, 1.0
      %v386 = vadd.f32 %v380, 1.0
      %v387 = vadd.f32 %v382, 1.0
      %v388 = vadd.f32 %v384, 1.0
      %v389 = vrcp.pop %v385
      %v390 = vmul.f32 1.0, %v389
      %v391 = vrcp.pop %v386
      %v392 = vmul.f32 1.0, %v391
      %v393 = vrcp.pop %v387
      %v394 = vmul.f32 1.0, %v393
      %v395 = vrcp.pop %v388
      %v396 = vmul.f32 1.0, %v395
      %398 = vset.pattern.permute.xlu0 0
      %399 = vperm.xlu0 %398, %v390
      %v400 = vpop.permute.xlu0 %399
      %403 = vset.pattern.permute.xlu0 0
      %404 = vperm.xlu0 %403, %v392
      %v405 = vpop.permute.xlu0 %404
      %408 = vset.pattern.permute.xlu0 0
      %409 = vperm.xlu0 %408, %v394
      %v410 = vpop.permute.xlu0 %409
      %413 = vset.pattern.permute.xlu0 0
      %414 = vperm.xlu0 %413, %v396
      %v415 = vpop.permute.xlu0 %414
      %v417 = vmul.f32 %v171, %v400
      %v418 = vmul.f32 %v172, %v400
      %v419 = vmul.f32 %v173, %v405
      %v420 = vmul.f32 %v174, %v405
      %v421 = vmul.f32 %v175, %v410
      %v422 = vmul.f32 %v176, %v410
      %v423 = vmul.f32 %v177, %v415
      %v424 = vmul.f32 %v178, %v415
      %425 = vst [vmem:[%s170] sm:$0xff] %v417
      %426 = vst [vmem:[%s170 + $0x8] sm:$0xff] %v418
      %427 = vst [vmem:[%s170 + $0x10] sm:$0xff] %v419
      %428 = vst [vmem:[%s170 + $0x18] sm:$0xff] %v420
      %429 = vst [vmem:[%s170 + $0x20] sm:$0xff] %v421
      %430 = vst [vmem:[%s170 + $0x28] sm:$0xff] %v422
      %431 = vst [vmem:[%s170 + $0x30] sm:$0xff] %v423
      %432 = vst [vmem:[%s170 + $0x38] sm:$0xff] %v424
      %p433 = scmp.lt.s32.totalorder %s14, 1
      %s434 = scalar_select %p433, %s14, 1
      %s435 = smul.addr %s434, 8
      %s436 = smul.addr %s435, 8
      %s437 = scalar_lea.vmem %s3, %s436
      // Predicated region
      $region33: #{se_layer.1} parent=31 // pred_check
        %p438 = pneg %p100
      $region34: #{se_layer.1} parent=31 // pred_check_branch
        %440 = sbr.rel (%p438) target = $region36
      $region35: #{se_layer.1} parent=31 // pred_region
        _
      $region36: #{se_layer.1} parent=31 // pred_fallthru
        _
    $region32: #{se_layer.1} parent=5 // pred_fallthru
      _
    %p441 = scmp.le.s32.totalorder 2, %s9
    // Predicated region
    $region37: #{se_layer.1} parent=5 // pred_check
      %p442 = pneg %p441
    $region38: #{se_layer.1} parent=5 // pred_check_branch
      %444 = sbr.rel (%p442) target = $region40
    $region39: #{se_layer.1} parent=5 // pred_region
      %s445 = ssub.s32 %s9, 2
      // Predicated region
      $region41: #{se_layer.1} parent=39 // pred_check
        %p446 = pneg %p106
      $region42: #{se_layer.1} parent=39 // pred_check_branch
        %448 = sbr.rel (%p446) target = $region44
      $region43: #{se_layer.1} parent=39 // pred_region
        %p449 = scmp.lt.s32.totalorder %s15, 1
        %s450 = scalar_select %p449, %s15, 1
        %s451 = smul.addr %s450, 8
        %s452 = smul.addr %s451, 8
        %s453 = scalar_lea.vmem %s3, %s452
      $region44: #{se_layer.1} parent=39 // pred_fallthru
        _
    $region40: #{se_layer.1} parent=5 // pred_fallthru
      _
  $region6: #{se_layer.1} parent=0 // loop_footer
    %s13 = sadd.s32 1, %s9
  $region7: #{se_layer.1} parent=0 // loop_footer_branch
    %8 = sbr.rel target = $region3
  $region8: #{se_layer.1} parent=0 // loop_exit
    _

</llo_original>
